<compile_context>
chip_gen: v6e
topology: v6e:2x2x1
jax: 0.10.0
libtpu: 0.0.40
codegen_flags: <defaults>
</compile_context>

<pallas_src>
import jax
import jax.numpy as jnp
import numpy as np
from jax import lax
from jax.experimental import pallas as pl
from jax.experimental.pallas import tpu as pltpu


def _mlp_kernel(x_ref,
                w1_ref, b1_ref,
                w2_ref, b2_ref,
                w3_ref, b3_ref,
                w4_ref, b4_ref,
                o_ref):
    # x_ref : (tile, input_size)   row-major block of x (natural layout).
    # w1..3 : (out_features, in_features) in compute dtype (PyTorch layout).
    # w4_ref: (hidden, output_size)  == w4.T, pre-transposed in the wrapper.
    # b1..3 : (out_features, 1) f32 ; b4_ref: (1, output_size) f32.
    # o_ref : (tile, output_size)  row-major output block.
    cdt = w1_ref.dtype
    x = x_ref[...].astype(cdt)                     # in-kernel cast, no HBM pass

    # Layer 1: fold the row->lane transpose into the MXU feed.
    # (hidden, in) . (tile, in)^T -> (hidden, tile)   [lane-dense activations]
    h = lax.dot_general(w1_ref[...], x, (((1,), (1,)), ((), ())),
                        preferred_element_type=jnp.float32)
    h = jnp.maximum(h + b1_ref[...], 0.0)

    # Layers 2-3: standard (hidden, hidden) x (hidden, tile) MXU matmuls.
    h = jnp.dot(w2_ref[...], h.astype(cdt), preferred_element_type=jnp.float32)
    h = jnp.maximum(h + b2_ref[...], 0.0)

    h = jnp.dot(w3_ref[...], h.astype(cdt), preferred_element_type=jnp.float32)
    h = jnp.maximum(h + b3_ref[...], 0.0)

    # Layer 4: trans_a contraction -> (tile, output_size) row-major, so the
    # output store needs no wrapper-side transpose.
    o = lax.dot_general(h.astype(cdt), w4_ref[...], (((0,), (0,)), ((), ())),
                        preferred_element_type=jnp.float32)
    o_ref[...] = jnp.maximum(o + b4_ref[...], 0.0).astype(o_ref.dtype)


def _round_up(v, mult):
    return ((int(v) + mult - 1) // mult) * mult


def reference_forward(x, params):
    """Plain-XLA reference (also used as the tiny-M fallback path)."""
    batch, n_rel, input_size = x.shape
    h = x.reshape(-1, input_size)
    for (w, b) in params:
        h = jnp.maximum(h @ w.T + b[:, 0], 0.0)
    return h.reshape(batch, n_rel, -1)


def relational_model_forward(x, params, *, tile_rows=2048,
                             compute_dtype=jnp.bfloat16,
                             min_pallas_rows=1024,
                             vmem_limit_bytes=None):
    """x: [batch, n_relations, input_size] -> [batch, n_relations, output_size].

    params: list of 4 (w, b); w: (out_features, in_features) [PyTorch layout],
    b: (out_features, 1), all float32.
    """
    (w1, b1), (w2, b2), (w3, b3), (w4, b4) = params
    batch, n_rel, input_size = x.shape
    hidden = w1.shape[0]
    output_size = w4.shape[0]
    m = batch * n_rel

    # Tiny problems: launch + one mostly-masked tile is not worth a custom
    # kernel; use the plain XLA path (exact module semantics, f32).
    if m < min_pallas_rows:
        return reference_forward(x, params).astype(x.dtype)

    if compute_dtype is None:
        compute_dtype = x.dtype
    compute_dtype = jnp.dtype(compute_dtype)
    x_bytes = jnp.dtype(x.dtype).itemsize
    c_bytes = compute_dtype.itemsize

    # --- Parameter prep (tiny, one-time per call; cast outside if calling in
    # a hot loop with static params). -------------------------------------
    w1c = w1.astype(compute_dtype)
    w2c = w2.astype(compute_dtype)
    w3c = w3.astype(compute_dtype)
    w4c = w4.astype(compute_dtype).T                 # (hidden, output_size)
    b1f = b1.astype(jnp.float32)
    b2f = b2.astype(jnp.float32)
    b3f = b3.astype(jnp.float32)
    b4f = b4.astype(jnp.float32).reshape(1, output_size)

    # x in natural row-major layout; reshape is a free bitcast.
    x2 = x.reshape(m, input_size)

    # --- Tile sizing ------------------------------------------------------
    # Per-row VMEM bytes of one grid step: double-buffered x and out blocks
    # (both padded to 128 lanes in VMEM) plus ~4 live f32 activation slabs.
    per_row = 2 * 128 * x_bytes + 2 * 128 * x_bytes + 4 * hidden * 4
    tile_cap = max(512, ((12 << 20) // per_row) // 512 * 512)   # ~12 MiB/step

    if m <= 512:
        tile = m                                    # single full block, no masking
    else:
        tile = _round_up(max(int(tile_rows), 512), 512)
        tile = min(tile, tile_cap)
        # v7x megacore: keep >= 2 grid steps so both TensorCores get work.
        tile = min(tile, _round_up(-(-m // 2), 512))
    grid = (pl.cdiv(m, tile),)

    x_spec = pl.BlockSpec((tile, input_size), lambda i: (i, 0))
    o_spec = pl.BlockSpec((tile, output_size), lambda i: (i, 0))

    def resident(a):
        # Constant index_map: fetched once, stays in VMEM across grid steps.
        return pl.BlockSpec(a.shape, lambda i: (0, 0))

    cp_kwargs = dict(dimension_semantics=("parallel",))
    if vmem_limit_bytes is not None:
        cp_kwargs["vmem_limit_bytes"] = int(vmem_limit_bytes)

    flops = 2 * m * (input_size * hidden + 2 * hidden * hidden
                     + hidden * output_size)
    param_bytes = (sum(int(w.size) for w in (w1, w2, w3, w4)) * c_bytes
                   + sum(int(b.size) for b in (b1, b2, b3, b4)) * 4)
    bytes_accessed = m * (input_size + output_size) * x_bytes + param_bytes
    cost = pl.CostEstimate(flops=flops, transcendentals=0,
                           bytes_accessed=bytes_accessed)

    out2 = pl.pallas_call(
        _mlp_kernel,
        out_shape=jax.ShapeDtypeStruct((m, output_size), x.dtype),
        grid_spec=pltpu.PrefetchScalarGridSpec(
            num_scalar_prefetch=0,
            grid=grid,
            in_specs=[
                x_spec,
                resident(w1c), resident(b1f),
                resident(w2c), resident(b2f),
                resident(w3c), resident(b3f),
                resident(w4c), resident(b4f),
            ],
            out_specs=o_spec,
        ),
        compiler_params=pltpu.CompilerParams(**cp_kwargs),
        cost_estimate=cost,
    )(x2, w1c, b1f, w2c, b2f, w3c, b3f, w4c, b4f)

    # Free bitcast back to the module's output shape.
    return out2.reshape(batch, n_rel, output_size)


def init_params(key, input_size, hidden_size, output_size):
    """PyTorch nn.Linear-style init; weights stored (out_features, in_features)."""
    dims = [(input_size, hidden_size),
            (hidden_size, hidden_size),
            (hidden_size, hidden_size),
            (hidden_size, output_size)]
    params = []
    for fan_in, fan_out in dims:
        key, kw, kb = jax.random.split(key, 3)
        bound = 1.0 / np.sqrt(fan_in)
        w = jax.random.uniform(kw, (fan_out, fan_in), jnp.float32, -bound, bound)
        b = jax.random.uniform(kb, (fan_out, 1), jnp.float32, -bound, bound)
        params.append((w, b))
    return params


if __name__ == "__main__":
    # interaction_network_parallel.py: n_objects = 3 -> n_relations = 6
    batch, n_relations = 2, 6
    input_size, hidden_size, output_size = 16, 32, 8

    key = jax.random.PRNGKey(0)
    key, kx = jax.random.split(key)
    x = jax.random.normal(kx, (batch, n_relations, input_size), jnp.float32)
    params = init_params(key, input_size, hidden_size, output_size)
    ref = reference_forward(x, params)

    # 1) Small M, f32 path, Pallas forced (production dispatch would use the
    #    XLA fallback at this size).  Single full block, no edge masking.
    out = jax.block_until_ready(
        relational_model_forward(x, params, compute_dtype=None,
                                 min_pallas_rows=0))
    assert out.shape == (batch, n_relations, output_size)
    np.testing.assert_allclose(np.asarray(out), np.asarray(ref),
                               rtol=1e-5, atol=1e-5)

    # 2) Same small input through the default dispatch (tiny-M XLA fallback).
    out_xla = jax.block_until_ready(relational_model_forward(x, params))
    np.testing.assert_allclose(np.asarray(out_xla), np.asarray(ref),
                               rtol=1e-6, atol=1e-6)

    # 3) Multi-step grid with a partial edge block, bf16 default compute:
    #    m = 200*6 = 1200, tile_rows=512 -> 3 grid steps (last one partial).
    key, kx2 = jax.random.split(key)
    x_big = jax.random.normal(kx2, (200, n_relations, input_size), jnp.float32)
    ref_big = reference_forward(x_big, params)
    out_big = jax.block_until_ready(
        relational_model_forward(x_big, params, tile_rows=512))
    np.testing.assert_allclose(np.asarray(out_big), np.asarray(ref_big),
                               rtol=5e-2, atol=5e-2)

    # 4) Same input, f32 path with default tile sizing (tile capped to keep
    #    >= 2 grid steps -> both v7x TensorCores busy).
    out_big_f32 = jax.block_until_ready(
        relational_model_forward(x_big, params, compute_dtype=None))
    np.testing.assert_allclose(np.asarray(out_big_f32), np.asarray(ref_big),
                               rtol=1e-5, atol=1e-5)

    print("KERNEL_OK")
</pallas_src>

<mosaic_0001>
module attributes {stable_mosaic.version = 11 : i64} {
  func.func @_mlp_kernel(%arg0: i32, %arg1: memref<12x16xf32, #tpu.memory_space<vmem>>, %arg2: memref<32x16xf32, #tpu.memory_space<vmem>>, %arg3: memref<32x1xf32, #tpu.memory_space<vmem>>, %arg4: memref<32x32xf32, #tpu.memory_space<vmem>>, %arg5: memref<32x1xf32, #tpu.memory_space<vmem>>, %arg6: memref<32x32xf32, #tpu.memory_space<vmem>>, %arg7: memref<32x1xf32, #tpu.memory_space<vmem>>, %arg8: memref<32x8xf32, #tpu.memory_space<vmem>>, %arg9: memref<1x8xf32, #tpu.memory_space<vmem>>, %arg10: memref<12x8xf32, #tpu.memory_space<vmem>>) attributes {dimension_semantics = [#tpu.dimension_semantics<parallel>], iteration_bounds = array<i64: 1>, scalar_prefetch = 0 : i64, scratch_operands = 0 : i64, tpu.core_type = #tpu.core_type<tc>, window_params = [{transform_indices = @transform_0, window_bounds = array<i64: 12, 16>}, {pipeline_mode = #tpu.pipeline_mode<synchronous>, transform_indices = @transform_1, window_bounds = array<i64: 32, 16>}, {pipeline_mode = #tpu.pipeline_mode<synchronous>, transform_indices = @transform_2, window_bounds = array<i64: 32, 1>}, {pipeline_mode = #tpu.pipeline_mode<synchronous>, transform_indices = @transform_3, window_bounds = array<i64: 32, 32>}, {pipeline_mode = #tpu.pipeline_mode<synchronous>, transform_indices = @transform_4, window_bounds = array<i64: 32, 1>}, {pipeline_mode = #tpu.pipeline_mode<synchronous>, transform_indices = @transform_5, window_bounds = array<i64: 32, 32>}, {pipeline_mode = #tpu.pipeline_mode<synchronous>, transform_indices = @transform_6, window_bounds = array<i64: 32, 1>}, {pipeline_mode = #tpu.pipeline_mode<synchronous>, transform_indices = @transform_7, window_bounds = array<i64: 32, 8>}, {pipeline_mode = #tpu.pipeline_mode<synchronous>, transform_indices = @transform_8, window_bounds = array<i64: 1, 8>}, {transform_indices = @transform_9, window_bounds = array<i64: 12, 8>}]} {
    %c0 = arith.constant 0 : index
    %c0_0 = arith.constant 0 : index
    %0 = vector.load %arg1[%c0, %c0_0] : memref<12x16xf32, #tpu.memory_space<vmem>>, vector<12x16xf32>
    %c0_1 = arith.constant 0 : index
    %c0_2 = arith.constant 0 : index
    %1 = vector.load %arg2[%c0_1, %c0_2] : memref<32x16xf32, #tpu.memory_space<vmem>>, vector<32x16xf32>
    %cst = arith.constant dense<0.000000e+00> : vector<32x12xf32>
    %2 = tpu.matmul %1, %0, %cst {dimension_numbers = #tpu.dot_dimension_numbers<[1], [1], [0], [0], [0, 0, 1, 0], [], []>} : vector<32x16xf32>, vector<12x16xf32>, vector<32x12xf32> -> vector<32x12xf32>
    %c0_3 = arith.constant 0 : index
    %c0_4 = arith.constant 0 : index
    %3 = vector.load %arg3[%c0_3, %c0_4] : memref<32x1xf32, #tpu.memory_space<vmem>>, vector<32x1xf32>
    %4 = vector.broadcast %3 : vector<32x1xf32> to vector<32x12xf32>
    %5 = arith.addf %2, %4 : vector<32x12xf32>
    %cst_5 = arith.constant 0.000000e+00 : f32
    %6 = vector.broadcast %cst_5 : f32 to vector<32x12xf32>
    %7 = arith.maximumf %5, %6 : vector<32x12xf32>
    %c0_6 = arith.constant 0 : index
    %c0_7 = arith.constant 0 : index
    %8 = vector.load %arg4[%c0_6, %c0_7] : memref<32x32xf32, #tpu.memory_space<vmem>>, vector<32x32xf32>
    %cst_8 = arith.constant dense<0.000000e+00> : vector<32x12xf32>
    %9 = tpu.matmul %8, %7, %cst_8 {dimension_numbers = #tpu.dot_dimension_numbers<[1], [0], [0], [1], [0, 0, 1, 1], [], []>} : vector<32x32xf32>, vector<32x12xf32>, vector<32x12xf32> -> vector<32x12xf32>
    %c0_9 = arith.constant 0 : index
    %c0_10 = arith.constant 0 : index
    %10 = vector.load %arg5[%c0_9, %c0_10] : memref<32x1xf32, #tpu.memory_space<vmem>>, vector<32x1xf32>
    %11 = vector.broadcast %10 : vector<32x1xf32> to vector<32x12xf32>
    %12 = arith.addf %9, %11 : vector<32x12xf32>
    %cst_11 = arith.constant 0.000000e+00 : f32
    %13 = vector.broadcast %cst_11 : f32 to vector<32x12xf32>
    %14 = arith.maximumf %12, %13 : vector<32x12xf32>
    %c0_12 = arith.constant 0 : index
    %c0_13 = arith.constant 0 : index
    %15 = vector.load %arg6[%c0_12, %c0_13] : memref<32x32xf32, #tpu.memory_space<vmem>>, vector<32x32xf32>
    %cst_14 = arith.constant dense<0.000000e+00> : vector<32x12xf32>
    %16 = tpu.matmul %15, %14, %cst_14 {dimension_numbers = #tpu.dot_dimension_numbers<[1], [0], [0], [1], [0, 0, 1, 1], [], []>} : vector<32x32xf32>, vector<32x12xf32>, vector<32x12xf32> -> vector<32x12xf32>
    %c0_15 = arith.constant 0 : index
    %c0_16 = arith.constant 0 : index
    %17 = vector.load %arg7[%c0_15, %c0_16] : memref<32x1xf32, #tpu.memory_space<vmem>>, vector<32x1xf32>
    %18 = vector.broadcast %17 : vector<32x1xf32> to vector<32x12xf32>
    %19 = arith.addf %16, %18 : vector<32x12xf32>
    %cst_17 = arith.constant 0.000000e+00 : f32
    %20 = vector.broadcast %cst_17 : f32 to vector<32x12xf32>
    %21 = arith.maximumf %19, %20 : vector<32x12xf32>
    %c0_18 = arith.constant 0 : index
    %c0_19 = arith.constant 0 : index
    %22 = vector.load %arg8[%c0_18, %c0_19] : memref<32x8xf32, #tpu.memory_space<vmem>>, vector<32x8xf32>
    %cst_20 = arith.constant dense<0.000000e+00> : vector<12x8xf32>
    %23 = tpu.matmul %21, %22, %cst_20 {dimension_numbers = #tpu.dot_dimension_numbers<[0], [0], [1], [1], [0, 1, 1, 1], [], []>} : vector<32x12xf32>, vector<32x8xf32>, vector<12x8xf32> -> vector<12x8xf32>
    %c0_21 = arith.constant 0 : index
    %c0_22 = arith.constant 0 : index
    %24 = vector.load %arg9[%c0_21, %c0_22] : memref<1x8xf32, #tpu.memory_space<vmem>>, vector<1x8xf32>
    %25 = vector.broadcast %24 : vector<1x8xf32> to vector<12x8xf32>
    %26 = arith.addf %23, %25 : vector<12x8xf32>
    %cst_23 = arith.constant 0.000000e+00 : f32
    %27 = vector.broadcast %cst_23 : f32 to vector<12x8xf32>
    %28 = arith.maximumf %26, %27 : vector<12x8xf32>
    %c0_24 = arith.constant 0 : index
    %c0_25 = arith.constant 0 : index
    %29 = vector.load %arg10[%c0_24, %c0_25] : memref<12x8xf32, #tpu.memory_space<vmem>>, vector<12x8xf32>
    tpu.vector_store %arg10[%c0_24, %c0_25], %28 {strides = array<i32>} : memref<12x8xf32, #tpu.memory_space<vmem>>, vector<12x8xf32>,
    return
  }
  func.func @transform_0(%arg0: i32) -> (i32, i32) {
    %c0_i32 = arith.constant 0 : i32
    %c0_i32_0 = arith.constant 0 : i32
    return %arg0, %c0_i32 : i32, i32
  }
  func.func @transform_1(%arg0: i32) -> (i32, i32) {
    %c0_i32 = arith.constant 0 : i32
    %c0_i32_0 = arith.constant 0 : i32
    %c0_i32_1 = arith.constant 0 : i32
    return %c0_i32, %c0_i32_0 : i32, i32
  }
  func.func @transform_2(%arg0: i32) -> (i32, i32) {
    %c0_i32 = arith.constant 0 : i32
    %c0_i32_0 = arith.constant 0 : i32
    %c0_i32_1 = arith.constant 0 : i32
    return %c0_i32, %c0_i32_0 : i32, i32
  }
  func.func @transform_3(%arg0: i32) -> (i32, i32) {
    %c0_i32 = arith.constant 0 : i32
    %c0_i32_0 = arith.constant 0 : i32
    %c0_i32_1 = arith.constant 0 : i32
    return %c0_i32, %c0_i32_0 : i32, i32
  }
  func.func @transform_4(%arg0: i32) -> (i32, i32) {
    %c0_i32 = arith.constant 0 : i32
    %c0_i32_0 = arith.constant 0 : i32
    %c0_i32_1 = arith.constant 0 : i32
    return %c0_i32, %c0_i32_0 : i32, i32
  }
  func.func @transform_5(%arg0: i32) -> (i32, i32) {
    %c0_i32 = arith.constant 0 : i32
    %c0_i32_0 = arith.constant 0 : i32
    %c0_i32_1 = arith.constant 0 : i32
    return %c0_i32, %c0_i32_0 : i32, i32
  }
  func.func @transform_6(%arg0: i32) -> (i32, i32) {
    %c0_i32 = arith.constant 0 : i32
    %c0_i32_0 = arith.constant 0 : i32
    %c0_i32_1 = arith.constant 0 : i32
    return %c0_i32, %c0_i32_0 : i32, i32
  }
  func.func @transform_7(%arg0: i32) -> (i32, i32) {
    %c0_i32 = arith.constant 0 : i32
    %c0_i32_0 = arith.constant 0 : i32
    %c0_i32_1 = arith.constant 0 : i32
    return %c0_i32, %c0_i32_0 : i32, i32
  }
  func.func @transform_8(%arg0: i32) -> (i32, i32) {
    %c0_i32 = arith.constant 0 : i32
    %c0_i32_0 = arith.constant 0 : i32
    %c0_i32_1 = arith.constant 0 : i32
    return %c0_i32, %c0_i32_0 : i32, i32
  }
  func.func @transform_9(%arg0: i32) -> (i32, i32) {
    %c0_i32 = arith.constant 0 : i32
    %c0_i32_0 = arith.constant 0 : i32
    return %arg0, %c0_i32 : i32, i32
  }
}

</mosaic_0001>

<llo_original>
// kernel: tpu_custom_call.1
$region0: #{tpu_custom_call.1}
  #allocation0 [shape = 'u32[]', space=smem, size = 0x4, offset = 0x4, fixed_abs, tag = 'smem constant byte address 0x4 - core index']
  #allocation1 [shape = 'u32[144,128]{1,0:T(1,128)}', space=vmem, size = 0x12000, scoped, tag = 'internal scratch']
  %s0 = inlined_call_operand.vmem [shape: f32[12,16], index: 0, kind: input, shape index: {}]
  %s1 = inlined_call_operand.vmem [shape: f32[32,16], index: 1, kind: input, shape index: {}]
  %s2 = inlined_call_operand.vmem [shape: f32[32,1], index: 2, kind: input, shape index: {}]
  %s3 = inlined_call_operand.vmem [shape: f32[32,32], index: 3, kind: input, shape index: {}]
  %s4 = inlined_call_operand.vmem [shape: f32[32,1], index: 4, kind: input, shape index: {}]
  %s5 = inlined_call_operand.vmem [shape: f32[32,32], index: 5, kind: input, shape index: {}]
  %s6 = inlined_call_operand.vmem [shape: f32[32,1], index: 6, kind: input, shape index: {}]
  %s7 = inlined_call_operand.vmem [shape: f32[32,8], index: 7, kind: input, shape index: {}]
  %s8 = inlined_call_operand.vmem [shape: f32[1,8], index: 8, kind: input, shape index: {}]
  %s9 = inlined_call_operand.vmem [shape: f32[12,8], index: 9, kind: output, shape index: {}]
  %s10 = sld [smem:[#allocation0]]
  $region46: #{tpu_custom_call.1} parent=0
    _
  %s12 = ssub.s32 1, %s10
  %s13 = scalar_select 0, %s12, %s10
  // Predicated region
  $region2: #{tpu_custom_call.1} parent=0 // pred_check
    _
  $region3: #{tpu_custom_call.1} parent=0 // pred_check_branch
    %15 = sbr.rel (0) target = $region5
  $region4: #{tpu_custom_call.1} parent=0 // pred_region
    _
  $region5: #{tpu_custom_call.1} parent=0 // pred_fallthru
    _
  // Predicated region
  $region6: #{tpu_custom_call.1} parent=0 // pred_check
    _
  $region7: #{tpu_custom_call.1} parent=0 // pred_check_branch
    %17 = sbr.rel (0) target = $region9
  $region8: #{tpu_custom_call.1} parent=0 // pred_region
    _
  $region9: #{tpu_custom_call.1} parent=0 // pred_fallthru
    _
  // Predicated region
  $region10: #{tpu_custom_call.1} parent=0 // pred_check
    _
  $region11: #{tpu_custom_call.1} parent=0 // pred_check_branch
    %19 = sbr.rel (0) target = $region13
  $region12: #{tpu_custom_call.1} parent=0 // pred_region
    _
  $region13: #{tpu_custom_call.1} parent=0 // pred_fallthru
    _
  // Predicated region
  $region14: #{tpu_custom_call.1} parent=0 // pred_check
    _
  $region15: #{tpu_custom_call.1} parent=0 // pred_check_branch
    %21 = sbr.rel (0) target = $region17
  $region16: #{tpu_custom_call.1} parent=0 // pred_region
    _
  $region17: #{tpu_custom_call.1} parent=0 // pred_fallthru
    _
  // Predicated region
  $region18: #{tpu_custom_call.1} parent=0 // pred_check
    _
  $region19: #{tpu_custom_call.1} parent=0 // pred_check_branch
    %23 = sbr.rel (0) target = $region21
  $region20: #{tpu_custom_call.1} parent=0 // pred_region
    _
  $region21: #{tpu_custom_call.1} parent=0 // pred_fallthru
    _
  // Predicated region
  $region22: #{tpu_custom_call.1} parent=0 // pred_check
    _
  $region23: #{tpu_custom_call.1} parent=0 // pred_check_branch
    %25 = sbr.rel (0) target = $region25
  $region24: #{tpu_custom_call.1} parent=0 // pred_region
    _
  $region25: #{tpu_custom_call.1} parent=0 // pred_fallthru
    _
  // Predicated region
  $region26: #{tpu_custom_call.1} parent=0 // pred_check
    _
  $region27: #{tpu_custom_call.1} parent=0 // pred_check_branch
    %27 = sbr.rel (0) target = $region29
  $region28: #{tpu_custom_call.1} parent=0 // pred_region
    _
  $region29: #{tpu_custom_call.1} parent=0 // pred_fallthru
    _
  // Predicated region
  $region30: #{tpu_custom_call.1} parent=0 // pred_check
    _
  $region31: #{tpu_custom_call.1} parent=0 // pred_check_branch
    %29 = sbr.rel (0) target = $region33
  $region32: #{tpu_custom_call.1} parent=0 // pred_region
    _
  $region33: #{tpu_custom_call.1} parent=0 // pred_fallthru
    _
  // Predicated region
  $region34: #{tpu_custom_call.1} parent=0 // pred_check
    _
  $region35: #{tpu_custom_call.1} parent=0 // pred_check_branch
    %31 = sbr.rel (0) target = $region37
  $region36: #{tpu_custom_call.1} parent=0 // pred_region
    _
  $region37: #{tpu_custom_call.1} parent=0 // pred_fallthru
    _
  %v32 = vld [vmem:[%s0] sm:$0xff]
  %v33 = vld [vmem:[%s0 + $0x8] sm:$0xf]
  %v34 = vld [vmem:[%s1] sm:$0xff]
  %v35 = vld [vmem:[%s1 + $0x8] sm:$0xff]
  %v36 = vld [vmem:[%s1 + $0x10] sm:$0xff]
  %v37 = vld [vmem:[%s1 + $0x18] sm:$0xff]
  %v38 = vld [vmem:[%s2] sm:$0xff]
  %v39 = vld [vmem:[%s2 + $0x8] sm:$0xff]
  %v40 = vld [vmem:[%s2 + $0x10] sm:$0xff]
  %v41 = vld [vmem:[%s2 + $0x18] sm:$0xff]
  %43 = vset.pattern.permute.xlu0 0
  %44 = vperm.xlu0 %43, %v38
  %v45 = vpop.permute.xlu0 %44
  %48 = vset.pattern.permute.xlu0 0
  %49 = vperm.xlu0 %48, %v39
  %v50 = vpop.permute.xlu0 %49
  %53 = vset.pattern.permute.xlu0 0
  %54 = vperm.xlu0 %53, %v40
  %v55 = vpop.permute.xlu0 %54
  %58 = vset.pattern.permute.xlu0 0
  %59 = vperm.xlu0 %58, %v41
  %v60 = vpop.permute.xlu0 %59
  %vm62 = vcmask 130048
  %v64 = vsel %vm62, %v34, 0
  %v67 = vsel %vm62, %v35, 0
  %v70 = vsel %vm62, %v36, 0
  %v73 = vsel %vm62, %v37, 0
  %v76 = vsel %vm62, %v32, 0
  %v79 = vsel %vm62, %v33, 0
  %81 = vmatprep.subr.mxu0 0.0
  %82 = vmatpush1.xpose.msra.mxu0 0.0
  %83 = vmatprep.subr.mxu0 0.0
  %84 = vmatpush1.xpose.msra.mxu0 0.0
  %85 = vmatprep.subr.mxu0 0.0
  %86 = vmatpush1.xpose.msra.mxu0 0.0
  %87 = vmatprep.subr.mxu0 0.0
  %88 = vmatpush1.xpose.msra.mxu0 0.0
  %89 = vmatprep.subr.mxu0 0.0
  %90 = vmatpush1.xpose.msra.mxu0 0.0
  %91 = vmatprep.subr.mxu0 0.0
  %92 = vmatpush1.xpose.msra.mxu0 0.0
  %93 = vmatprep.subr.mxu0 0.0
  %94 = vmatpush1.xpose.msra.mxu0 0.0
  %95 = vmatprep.subr.mxu0 0.0
  %96 = vmatpush1.xpose.msra.mxu0 0.0
  %97 = vmatprep.subr.mxu0 0.0
  %98 = vmatpush1.xpose.msra.mxu0 0.0
  %99 = vmatprep.subr.mxu0 0.0
  %100 = vmatpush1.xpose.msra.mxu0 0.0
  %101 = vmatprep.subr.mxu0 0.0
  %102 = vmatpush1.xpose.msra.mxu0 0.0
  %103 = vmatprep.subr.mxu0 0.0
  %104 = vmatpush1.xpose.msra.mxu0 0.0
  %105 = vmatprep.subr.mxu0 0.0
  %106 = vmatpush1.xpose.msra.mxu0 0.0
  %107 = vmatprep.subr.mxu0 0.0
  %108 = vmatpush1.xpose.msra.mxu0 0.0
  %109 = vmatprep.subr.mxu0 0.0
  %110 = vmatpush1.xpose.msra.mxu0 %v79
  %111 = vmatprep.subr.mxu0 0.0
  %112 = vmatpush1.xpose.msra.mxu0 %v76
  %113 = vmatprep.subr.mxu0 0.0
  %114 = vmatpush2.xpose.msra.mxu0 0.0
  %115 = vmatprep.subr.mxu0 0.0
  %116 = vmatpush2.xpose.msra.mxu0 0.0
  %117 = vmatprep.subr.mxu0 0.0
  %118 = vmatpush2.xpose.msra.mxu0 0.0
  %119 = vmatprep.subr.mxu0 0.0
  %120 = vmatpush2.xpose.msra.mxu0 0.0
  %121 = vmatprep.subr.mxu0 0.0
  %122 = vmatpush2.xpose.msra.mxu0 0.0
  %123 = vmatprep.subr.mxu0 0.0
  %124 = vmatpush2.xpose.msra.mxu0 0.0
  %125 = vmatprep.subr.mxu0 0.0
  %126 = vmatpush2.xpose.msra.mxu0 0.0
  %127 = vmatprep.subr.mxu0 0.0
  %128 = vmatpush2.xpose.msra.mxu0 0.0
  %129 = vmatprep.subr.mxu0 0.0
  %130 = vmatpush2.xpose.msra.mxu0 0.0
  %131 = vmatprep.subr.mxu0 0.0
  %132 = vmatpush2.xpose.msra.mxu0 0.0
  %133 = vmatprep.subr.mxu0 0.0
  %134 = vmatpush2.xpose.msra.mxu0 0.0
  %135 = vmatprep.subr.mxu0 0.0
  %136 = vmatpush2.xpose.msra.mxu0 0.0
  %137 = vmatprep.subr.mxu0 0.0
  %138 = vmatpush2.xpose.msra.mxu0 0.0
  %139 = vmatprep.subr.mxu0 0.0
  %140 = vmatpush2.xpose.msra.mxu0 0.0
  %141 = vmatprep.subr.mxu0 0.0
  %142 = vmatpush2.xpose.msra.mxu0 0.0
  %143 = vmatprep.subr.mxu0 0.0
  %144 = vmatpush2.xpose.msra.mxu0 0.0
  %145 = vmatprep.mubr.f32.mxu0 0.0
  %146 = vmatmul.mubr.f32.gmra.mxu0 %v64
  %v147 = vpop.f32.mrf.mxu0
  %v148 = vadd.f32 %v45, %v147
  %v149 = vpop.f32.mrf.mxu0
  %150 = vmatprep.mubr.f32.mxu0 0.0
  %151 = vmatmul.mubr.f32.gmra.mxu0 %v67
  %v152 = vpop.f32.mrf.mxu0
  %v153 = vadd.f32 %v50, %v152
  %v154 = vpop.f32.mrf.mxu0
  %155 = vmatprep.mubr.f32.mxu0 0.0
  %156 = vmatmul.mubr.f32.gmra.mxu0 %v70
  %v157 = vpop.f32.mrf.mxu0
  %v158 = vadd.f32 %v55, %v157
  %v159 = vpop.f32.mrf.mxu0
  %160 = vmatprep.mubr.f32.mxu0 0.0
  %161 = vmatmul.mubr.f32.gmra.mxu0 %v73
  %v162 = vpop.f32.mrf.mxu0
  %v163 = vadd.f32 %v60, %v162
  %v164 = vpop.f32.mrf.mxu0
  %165 = vdwg.mxu0
  %v166 = vmax.f32 %v148, 0.0
  %v167 = vmax.f32 %v153, 0.0
  %v168 = vmax.f32 %v158, 0.0
  %v169 = vmax.f32 %v163, 0.0
  %v170 = vld [vmem:[%s3] sm:$0xff]
  %v171 = vld [vmem:[%s3 + $0x8] sm:$0xff]
  %v172 = vld [vmem:[%s3 + $0x10] sm:$0xff]
  %v173 = vld [vmem:[%s3 + $0x18] sm:$0xff]
  %v174 = vld [vmem:[%s4] sm:$0xff]
  %v175 = vld [vmem:[%s4 + $0x8] sm:$0xff]
  %v176 = vld [vmem:[%s4 + $0x10] sm:$0xff]
  %v177 = vld [vmem:[%s4 + $0x18] sm:$0xff]
  %179 = vset.pattern.permute.xlu0 0
  %180 = vperm.xlu0 %179, %v174
  %v181 = vpop.permute.xlu0 %180
  %184 = vset.pattern.permute.xlu0 0
  %185 = vperm.xlu0 %184, %v175
  %v186 = vpop.permute.xlu0 %185
  %189 = vset.pattern.permute.xlu0 0
  %190 = vperm.xlu0 %189, %v176
  %v191 = vpop.permute.xlu0 %190
  %194 = vset.pattern.permute.xlu0 0
  %195 = vperm.xlu0 %194, %v177
  %v196 = vpop.permute.xlu0 %195
  %vm198 = vcmask 261120
  %v200 = vsel %vm198, %v170, 0
  %v203 = vsel %vm198, %v171, 0
  %v206 = vsel %vm198, %v172, 0
  %v209 = vsel %vm198, %v173, 0
  %211 = vmatprep.subr.mxu0 0.0
  %212 = vmatpush1.msra.mxu0 0.0
  %213 = vmatprep.subr.mxu0 0.0
  %214 = vmatpush1.msra.mxu0 0.0
  %215 = vmatprep.subr.mxu0 0.0
  %216 = vmatpush1.msra.mxu0 0.0
  %217 = vmatprep.subr.mxu0 0.0
  %218 = vmatpush1.msra.mxu0 0.0
  %219 = vmatprep.subr.mxu0 0.0
  %220 = vmatpush1.msra.mxu0 0.0
  %221 = vmatprep.subr.mxu0 0.0
  %222 = vmatpush1.msra.mxu0 0.0
  %223 = vmatprep.subr.mxu0 0.0
  %224 = vmatpush1.msra.mxu0 0.0
  %225 = vmatprep.subr.mxu0 0.0
  %226 = vmatpush1.msra.mxu0 0.0
  %227 = vmatprep.subr.mxu0 0.0
  %228 = vmatpush1.msra.mxu0 0.0
  %229 = vmatprep.subr.mxu0 0.0
  %230 = vmatpush1.msra.mxu0 0.0
  %231 = vmatprep.subr.mxu0 0.0
  %232 = vmatpush1.msra.mxu0 0.0
  %233 = vmatprep.subr.mxu0 0.0
  %234 = vmatpush1.msra.mxu0 0.0
  %235 = vmatprep.subr.mxu0 0.0
  %236 = vmatpush1.msra.mxu0 %v169
  %237 = vmatprep.subr.mxu0 0.0
  %238 = vmatpush1.msra.mxu0 %v168
  %239 = vmatprep.subr.mxu0 0.0
  %240 = vmatpush1.msra.mxu0 %v167
  %241 = vmatprep.subr.mxu0 0.0
  %242 = vmatpush1.msra.mxu0 %v166
  %243 = vmatprep.subr.mxu0 0.0
  %244 = vmatpush2.msra.mxu0 0.0
  %245 = vmatprep.subr.mxu0 0.0
  %246 = vmatpush2.msra.mxu0 0.0
  %247 = vmatprep.subr.mxu0 0.0
  %248 = vmatpush2.msra.mxu0 0.0
  %249 = vmatprep.subr.mxu0 0.0
  %250 = vmatpush2.msra.mxu0 0.0
  %251 = vmatprep.subr.mxu0 0.0
  %252 = vmatpush2.msra.mxu0 0.0
  %253 = vmatprep.subr.mxu0 0.0
  %254 = vmatpush2.msra.mxu0 0.0
  %255 = vmatprep.subr.mxu0 0.0
  %256 = vmatpush2.msra.mxu0 0.0
  %257 = vmatprep.subr.mxu0 0.0
  %258 = vmatpush2.msra.mxu0 0.0
  %259 = vmatprep.subr.mxu0 0.0
  %260 = vmatpush2.msra.mxu0 0.0
  %261 = vmatprep.subr.mxu0 0.0
  %262 = vmatpush2.msra.mxu0 0.0
  %263 = vmatprep.subr.mxu0 0.0
  %264 = vmatpush2.msra.mxu0 0.0
  %265 = vmatprep.subr.mxu0 0.0
  %266 = vmatpush2.msra.mxu0 0.0
  %267 = vmatprep.subr.mxu0 0.0
  %268 = vmatpush2.msra.mxu0 0.0
  %269 = vmatprep.subr.mxu0 0.0
  %270 = vmatpush2.msra.mxu0 0.0
  %271 = vmatprep.subr.mxu0 0.0
  %272 = vmatpush2.msra.mxu0 0.0
  %273 = vmatprep.subr.mxu0 0.0
  %274 = vmatpush2.msra.mxu0 0.0
  %275 = vmatprep.mubr.f32.mxu0 0.0
  %276 = vmatmul.mubr.f32.gmra.mxu0 %v200
  %v277 = vpop.f32.mrf.mxu0
  %v278 = vadd.f32 %v181, %v277
  %v279 = vpop.f32.mrf.mxu0
  %280 = vmatprep.mubr.f32.mxu0 0.0
  %281 = vmatmul.mubr.f32.gmra.mxu0 %v203
  %v282 = vpop.f32.mrf.mxu0
  %v283 = vadd.f32 %v186, %v282
  %v284 = vpop.f32.mrf.mxu0
  %285 = vmatprep.mubr.f32.mxu0 0.0
  %286 = vmatmul.mubr.f32.gmra.mxu0 %v206
  %v287 = vpop.f32.mrf.mxu0
  %v288 = vadd.f32 %v191, %v287
  %v289 = vpop.f32.mrf.mxu0
  %290 = vmatprep.mubr.f32.mxu0 0.0
  %291 = vmatmul.mubr.f32.gmra.mxu0 %v209
  %v292 = vpop.f32.mrf.mxu0
  %v293 = vadd.f32 %v196, %v292
  %v294 = vpop.f32.mrf.mxu0
  %295 = vdwg.mxu0
  %v296 = vmax.f32 %v278, 0.0
  %v297 = vmax.f32 %v283, 0.0
  %v298 = vmax.f32 %v288, 0.0
  %v299 = vmax.f32 %v293, 0.0
  %v300 = vld [vmem:[%s5] sm:$0xff]
  %v301 = vld [vmem:[%s5 + $0x8] sm:$0xff]
  %v302 = vld [vmem:[%s5 + $0x10] sm:$0xff]
  %v303 = vld [vmem:[%s5 + $0x18] sm:$0xff]
  %v304 = vld [vmem:[%s6] sm:$0xff]
  %v305 = vld [vmem:[%s6 + $0x8] sm:$0xff]
  %v306 = vld [vmem:[%s6 + $0x10] sm:$0xff]
  %v307 = vld [vmem:[%s6 + $0x18] sm:$0xff]
  %309 = vset.pattern.permute.xlu0 0
  %310 = vperm.xlu0 %309, %v304
  %v311 = vpop.permute.xlu0 %310
  %314 = vset.pattern.permute.xlu0 0
  %315 = vperm.xlu0 %314, %v305
  %v316 = vpop.permute.xlu0 %315
  %319 = vset.pattern.permute.xlu0 0
  %320 = vperm.xlu0 %319, %v306
  %v321 = vpop.permute.xlu0 %320
  %324 = vset.pattern.permute.xlu0 0
  %325 = vperm.xlu0 %324, %v307
  %v326 = vpop.permute.xlu0 %325
  %v329 = vsel %vm198, %v300, 0
  %v332 = vsel %vm198, %v301, 0
  %v335 = vsel %vm198, %v302, 0
  %v338 = vsel %vm198, %v303, 0
  %340 = vmatprep.subr.mxu0 0.0
  %341 = vmatpush1.msra.mxu0 0.0
  %342 = vmatprep.subr.mxu0 0.0
  %343 = vmatpush1.msra.mxu0 0.0
  %344 = vmatprep.subr.mxu0 0.0
  %345 = vmatpush1.msra.mxu0 0.0
  %346 = vmatprep.subr.mxu0 0.0
  %347 = vmatpush1.msra.mxu0 0.0
  %348 = vmatprep.subr.mxu0 0.0
  %349 = vmatpush1.msra.mxu0 0.0
  %350 = vmatprep.subr.mxu0 0.0
  %351 = vmatpush1.msra.mxu0 0.0
  %352 = vmatprep.subr.mxu0 0.0
  %353 = vmatpush1.msra.mxu0 0.0
  %354 = vmatprep.subr.mxu0 0.0
  %355 = vmatpush1.msra.mxu0 0.0
  %356 = vmatprep.subr.mxu0 0.0
  %357 = vmatpush1.msra.mxu0 0.0
  %358 = vmatprep.subr.mxu0 0.0
  %359 = vmatpush1.msra.mxu0 0.0
  %360 = vmatprep.subr.mxu0 0.0
  %361 = vmatpush1.msra.mxu0 0.0
  %362 = vmatprep.subr.mxu0 0.0
  %363 = vmatpush1.msra.mxu0 0.0
  %364 = vmatprep.subr.mxu0 0.0
  %365 = vmatpush1.msra.mxu0 %v299
  %366 = vmatprep.subr.mxu0 0.0
  %367 = vmatpush1.msra.mxu0 %v298
  %368 = vmatprep.subr.mxu0 0.0
  %369 = vmatpush1.msra.mxu0 %v297
  %370 = vmatprep.subr.mxu0 0.0
  %371 = vmatpush1.msra.mxu0 %v296
  %372 = vmatprep.subr.mxu0 0.0
  %373 = vmatpush2.msra.mxu0 0.0
  %374 = vmatprep.subr.mxu0 0.0
  %375 = vmatpush2.msra.mxu0 0.0
  %376 = vmatprep.subr.mxu0 0.0
  %377 = vmatpush2.msra.mxu0 0.0
  %378 = vmatprep.subr.mxu0 0.0
  %379 = vmatpush2.msra.mxu0 0.0
  %380 = vmatprep.subr.mxu0 0.0
  %381 = vmatpush2.msra.mxu0 0.0
  %382 = vmatprep.subr.mxu0 0.0
  %383 = vmatpush2.msra.mxu0 0.0
  %384 = vmatprep.subr.mxu0 0.0
  %385 = vmatpush2.msra.mxu0 0.0
  %386 = vmatprep.subr.mxu0 0.0
  %387 = vmatpush2.msra.mxu0 0.0
  %388 = vmatprep.subr.mxu0 0.0
  %389 = vmatpush2.msra.mxu0 0.0
  %390 = vmatprep.subr.mxu0 0.0
  %391 = vmatpush2.msra.mxu0 0.0
  %392 = vmatprep.subr.mxu0 0.0
  %393 = vmatpush2.msra.mxu0 0.0
  %394 = vmatprep.subr.mxu0 0.0
  %395 = vmatpush2.msra.mxu0 0.0
  %396 = vmatprep.subr.mxu0 0.0
  %397 = vmatpush2.msra.mxu0 0.0
  %398 = vmatprep.subr.mxu0 0.0
  %399 = vmatpush2.msra.mxu0 0.0
  %400 = vmatprep.subr.mxu0 0.0
  %401 = vmatpush2.msra.mxu0 0.0
  %402 = vmatprep.subr.mxu0 0.0
  %403 = vmatpush2.msra.mxu0 0.0
  %404 = vmatprep.mubr.f32.mxu0 0.0
  %405 = vmatmul.mubr.f32.gmra.mxu0 %v329
  %v406 = vpop.f32.mrf.mxu0
  %v407 = vadd.f32 %v311, %v406
  %v408 = vpop.f32.mrf.mxu0
  %409 = vmatprep.mubr.f32.mxu0 0.0
  %410 = vmatmul.mubr.f32.gmra.mxu0 %v332
  %v411 = vpop.f32.mrf.mxu0
  %v412 = vadd.f32 %v316, %v411
  %v413 = vpop.f32.mrf.mxu0
  %414 = vmatprep.mubr.f32.mxu0 0.0
  %415 = vmatmul.mubr.f32.gmra.mxu0 %v335
  %v416 = vpop.f32.mrf.mxu0
  %v417 = vadd.f32 %v321, %v416
  %v418 = vpop.f32.mrf.mxu0
  %419 = vmatprep.mubr.f32.mxu0 0.0
  %420 = vmatmul.mubr.f32.gmra.mxu0 %v338
  %v421 = vpop.f32.mrf.mxu0
  %v422 = vadd.f32 %v326, %v421
  %v423 = vpop.f32.mrf.mxu0
  %424 = vdwg.mxu0
  %v425 = vmax.f32 %v407, 0.0
  %v426 = vmax.f32 %v412, 0.0
  %v427 = vmax.f32 %v417, 0.0
  %v428 = vmax.f32 %v422, 0.0
  %v429 = vld [vmem:[%s7] sm:$0xff]
  %v430 = vld [vmem:[%s7 + $0x8] sm:$0xff]
  %v431 = vld [vmem:[%s7 + $0x10] sm:$0xff]
  %v432 = vld [vmem:[%s7 + $0x18] sm:$0xff]
  %v433 = vld [vmem:[%s8] sm:$0x1]
  %v435 = vlaneseq
  %v436 = vshrl.u32 %v435, 7
  %v437 = vsub.s32 0, %v436
  %v438 = vrot.slane %v433, %v437
  %440 = vxpose.xlu0.b32.start [1/16] %v425, 128
  %441 = vxpose.xlu0.b32.cont [2/16] %v426, 128
  %442 = vxpose.xlu0.b32.cont [3/16] %v427, 128
  %443 = vxpose.xlu0.b32.cont [4/16] %v428, 128
  %444 = vxpose.xlu0.b32.cont [5/16] 0.0, 128
  %445 = vxpose.xlu0.b32.cont [6/16] 0.0, 128
  %446 = vxpose.xlu0.b32.cont [7/16] 0.0, 128
  %447 = vxpose.xlu0.b32.cont [8/16] 0.0, 128
  %448 = vxpose.xlu0.b32.cont [9/16] 0.0, 128
  %449 = vxpose.xlu0.b32.cont [10/16] 0.0, 128
  %450 = vxpose.xlu0.b32.cont [11/16] 0.0, 128
  %451 = vxpose.xlu0.b32.cont [12/16] 0.0, 128
  %452 = vxpose.xlu0.b32.cont [13/16] 0.0, 128
  %453 = vxpose.xlu0.b32.cont [14/16] 0.0, 128
  %454 = vxpose.xlu0.b32.cont [15/16] 0.0, 128
  %455 = vxpose.xlu0.b32.end [16/16] 0.0, 128
  %v456 = vpop.trf.xlu0
  %v457 = vpop.trf.xlu0
  %v458 = vpop.trf.xlu0
  %v459 = vpop.trf.xlu0
  %v460 = vpop.trf.xlu0
  %v461 = vpop.trf.xlu0
  %v462 = vpop.trf.xlu0
  %v463 = vpop.trf.xlu0
  %v464 = vpop.trf.xlu0
  %v465 = vpop.trf.xlu0
  %v466 = vpop.trf.xlu0
  %v467 = vpop.trf.xlu0
  %v468 = vpop.trf.xlu0
  %v469 = vpop.trf.xlu0
  %v470 = vpop.trf.xlu0
  %v471 = vpop.trf.xlu0
  %v473 = vsel %vm198, %v456, 0
  %v476 = vsel %vm198, %v457, 0
  %478 = vmatprep.subr.mxu0 0.0
  %479 = vmatpush1.msra.mxu0 0.0
  %480 = vmatprep.subr.mxu0 0.0
  %481 = vmatpush1.msra.mxu0 0.0
  %482 = vmatprep.subr.mxu0 0.0
  %483 = vmatpush1.msra.mxu0 0.0
  %484 = vmatprep.subr.mxu0 0.0
  %485 = vmatpush1.msra.mxu0 0.0
  %486 = vmatprep.subr.mxu0 0.0
  %487 = vmatpush1.msra.mxu0 0.0
  %488 = vmatprep.subr.mxu0 0.0
  %489 = vmatpush1.msra.mxu0 0.0
  %490 = vmatprep.subr.mxu0 0.0
  %491 = vmatpush1.msra.mxu0 0.0
  %492 = vmatprep.subr.mxu0 0.0
  %493 = vmatpush1.msra.mxu0 0.0
  %494 = vmatprep.subr.mxu0 0.0
  %495 = vmatpush1.msra.mxu0 0.0
  %496 = vmatprep.subr.mxu0 0.0
  %497 = vmatpush1.msra.mxu0 0.0
  %498 = vmatprep.subr.mxu0 0.0
  %499 = vmatpush1.msra.mxu0 0.0
  %500 = vmatprep.subr.mxu0 0.0
  %501 = vmatpush1.msra.mxu0 0.0
  %502 = vmatprep.subr.mxu0 0.0
  %503 = vmatpush1.msra.mxu0 %v432
  %504 = vmatprep.subr.mxu0 0.0
  %505 = vmatpush1.msra.mxu0 %v431
  %506 = vmatprep.subr.mxu0 0.0
  %507 = vmatpush1.msra.mxu0 %v430
  %508 = vmatprep.subr.mxu0 0.0
  %509 = vmatpush1.msra.mxu0 %v429
  %510 = vmatprep.subr.mxu0 0.0
  %511 = vmatpush2.msra.mxu0 0.0
  %512 = vmatprep.subr.mxu0 0.0
  %513 = vmatpush2.msra.mxu0 0.0
  %514 = vmatprep.subr.mxu0 0.0
  %515 = vmatpush2.msra.mxu0 0.0
  %516 = vmatprep.subr.mxu0 0.0
  %517 = vmatpush2.msra.mxu0 0.0
  %518 = vmatprep.subr.mxu0 0.0
  %519 = vmatpush2.msra.mxu0 0.0
  %520 = vmatprep.subr.mxu0 0.0
  %521 = vmatpush2.msra.mxu0 0.0
  %522 = vmatprep.subr.mxu0 0.0
  %523 = vmatpush2.msra.mxu0 0.0
  %524 = vmatprep.subr.mxu0 0.0
  %525 = vmatpush2.msra.mxu0 0.0
  %526 = vmatprep.subr.mxu0 0.0
  %527 = vmatpush2.msra.mxu0 0.0
  %528 = vmatprep.subr.mxu0 0.0
  %529 = vmatpush2.msra.mxu0 0.0
  %530 = vmatprep.subr.mxu0 0.0
  %531 = vmatpush2.msra.mxu0 0.0
  %532 = vmatprep.subr.mxu0 0.0
  %533 = vmatpush2.msra.mxu0 0.0
  %534 = vmatprep.subr.mxu0 0.0
  %535 = vmatpush2.msra.mxu0 0.0
  %536 = vmatprep.subr.mxu0 0.0
  %537 = vmatpush2.msra.mxu0 0.0
  %538 = vmatprep.subr.mxu0 0.0
  %539 = vmatpush2.msra.mxu0 0.0
  %540 = vmatprep.subr.mxu0 0.0
  %541 = vmatpush2.msra.mxu0 0.0
  %542 = vmatprep.mubr.f32.mxu0 0.0
  %543 = vmatmul.mubr.f32.gmra.mxu0 %v473
  %v544 = vpop.f32.mrf.mxu0
  %v545 = vadd.f32 %v438, %v544
  %v546 = vpop.f32.mrf.mxu0
  %547 = vmatprep.mubr.f32.mxu0 0.0
  %548 = vmatmul.mubr.f32.gmra.mxu0 %v476
  %v549 = vpop.f32.mrf.mxu0
  %v550 = vadd.f32 %v438, %v549
  %v551 = vpop.f32.mrf.mxu0
  %552 = vdwg.mxu0
  %v553 = vmax.f32 %v545, 0.0
  %v554 = vmax.f32 %v550, 0.0
  %vm555 = vcmask 64512
  %556 = vst.msk [vmem:[%s9] sm:$0xff] %vm555, %v553
  %vm557 = vcmask 60416
  %558 = vst.msk [vmem:[%s9 + $0x8] sm:$0xf] %vm557, %v554
  // Predicated region
  $region38: #{tpu_custom_call.1} parent=0 // pred_check
    _
  $region39: #{tpu_custom_call.1} parent=0 // pred_check_branch
    %560 = sbr.rel (0) target = $region41
  $region40: #{tpu_custom_call.1} parent=0 // pred_region
    _
  $region41: #{tpu_custom_call.1} parent=0 // pred_fallthru
    _
  // Predicated region
  $region42: #{tpu_custom_call.1} parent=0 // pred_check
    _
  $region43: #{tpu_custom_call.1} parent=0 // pred_check_branch
    %562 = sbr.rel (0) target = $region45
  $region44: #{tpu_custom_call.1} parent=0 // pred_region
    _
  $region45: #{tpu_custom_call.1} parent=0 // pred_fallthru
    _

</llo_original>
